<compile_context>
chip_gen: v7x
topology: tpu7x:2x2x1
jax: 0.10.0
libtpu: 0.0.40
codegen_flags: <defaults>
</compile_context>

<pallas_src>
import jax
import jax.numpy as jnp
from jax.experimental import pallas as pl
from jax.experimental.pallas import tpu as pltpu


def _round_up(x, m):
    return (x + m - 1) // m * m


def value_net_kernel(x_ref, w1_ref, b1_ref, w2_ref, b2_ref, o_ref):
    # fc1: (TB, S) @ (S, Hp) on the MXU, f32 accumulate.
    h = jnp.dot(x_ref[...], w1_ref[...], preferred_element_type=jnp.float32)
    # Bias + ReLU stay in f32 on the VPU (v5e has no bf16 VPU path).
    h = jnp.maximum(h + b1_ref[...], 0.0)
    # fc2 with a single output feature: VPU multiply + lane (XLU) reduction
    # instead of an N=1 MXU matmul; keeps h in f32 for the reduction.
    v = jnp.sum(h * w2_ref[...], axis=-1) + b2_ref[0, 0]        # (TB,)
    # Lane-dense store: one (1, TB) row per tile (unmasked full-width vst).
    o_ref[...] = v[None, :].astype(o_ref.dtype)


def value_net_forward(x, w1, b1, w2, b2, *, block_b=512, fc1_dtype=jnp.float32):
    """relu(x @ w1 + b1) @ w2 + b2;  x: [B, state_dim] -> [B, 1] (PyTorch ValueNet)."""
    B, S = x.shape
    H = w1.shape[1]

    # Zero-pad hidden dim to the 128-lane width. Exact math: padded b1 columns
    # are 0 (relu(0) == 0) and padded w2 rows are 0.
    Hp = _round_up(H, 128)
    if Hp != H:
        w1 = jnp.pad(w1, ((0, 0), (0, Hp - H)))
        b1 = jnp.pad(b1, ((0, 0), (0, Hp - H)))
        w2 = jnp.pad(w2, ((0, Hp - H), (0, 0)))
    w2_row = w2.reshape(1, Hp)        # row layout for the VPU broadcast-multiply
    b2 = b2.reshape(1, 1)

    # Batch tiling: single full block for small B; otherwise 512-row tiles
    # (multiple of 8 sublanes and 128 lanes -> clean blocks, lane-dense output).
    if B <= block_b:
        tb = _round_up(B, 8)
    else:
        tb = _round_up(block_b, 128)
    Bp = _round_up(B, tb)
    if Bp != B:
        x = jnp.pad(x, ((0, Bp - B), (0, 0)))
    num_tiles = Bp // tb

    # Optional bf16 inputs for the fc1 matmul (recommended on v6e/v7x at large
    # batch); accumulation stays f32 via preferred_element_type.
    x = x.astype(fc1_dtype)
    w1 = w1.astype(fc1_dtype)

    itemsize = jnp.dtype(fc1_dtype).itemsize
    cost = pl.CostEstimate(
        flops=2 * Bp * S * Hp + 2 * Bp * Hp,
        transcendentals=0,
        bytes_accessed=(x.size + w1.size) * itemsize
        + (Bp + b1.size + w2_row.size + 1) * 4,
    )

    out = pl.pallas_call(
        value_net_kernel,
        out_shape=jax.ShapeDtypeStruct((1, Bp), jnp.float32),
        grid=(num_tiles,),
        in_specs=[
            pl.BlockSpec((tb, S), lambda i: (i, 0)),    # x: streamed batch tiles
            pl.BlockSpec((S, Hp), lambda i: (0, 0)),    # w1: VMEM-resident
            pl.BlockSpec((1, Hp), lambda i: (0, 0)),    # b1: VMEM-resident
            pl.BlockSpec((1, Hp), lambda i: (0, 0)),    # w2 row: VMEM-resident
            pl.BlockSpec(memory_space=pltpu.MemorySpace.SMEM),  # b2: scalar in SMEM
        ],
        out_specs=pl.BlockSpec((1, tb), lambda i: (0, i)),      # lane-dense row
        compiler_params=pltpu.CompilerParams(
            dimension_semantics=("parallel",),          # megacore batch split (v7x)
        ),
        cost_estimate=cost,
    )(x, w1, b1, w2_row, b2)

    return out.reshape(Bp)[:B].reshape(B, 1)


def init_value_net_params(key, state_dim, hidden_dim):
    """torch.nn.Linear-style init (uniform +-1/sqrt(fan_in)); weights stored as
    (in_features, out_features), i.e. transposed vs. PyTorch."""
    k1, k2, k3, k4 = jax.random.split(key, 4)
    lim1 = 1.0 / jnp.sqrt(jnp.float32(state_dim))
    lim2 = 1.0 / jnp.sqrt(jnp.float32(hidden_dim))
    w1 = jax.random.uniform(k1, (state_dim, hidden_dim), jnp.float32, -lim1, lim1)
    b1 = jax.random.uniform(k2, (1, hidden_dim), jnp.float32, -lim1, lim1)
    w2 = jax.random.uniform(k3, (hidden_dim, 1), jnp.float32, -lim2, lim2)
    b2 = jax.random.uniform(k4, (1, 1), jnp.float32, -lim2, lim2)
    return w1, b1, w2, b2


if __name__ == "__main__":
    state_dim, hidden_dim = 16, 32

    key = jax.random.PRNGKey(0)
    kx, kp, kx2 = jax.random.split(key, 3)
    w1, b1, w2, b2 = init_value_net_params(kp, state_dim, hidden_dim)

    def ref_fn(xx):
        return jnp.maximum(xx @ w1 + b1, 0.0) @ w2 + b2

    # Small batch (single-tile path, like the original PPO usage).
    x_small = jax.random.normal(kx, (8, state_dim), jnp.float32)
    out_small = jax.block_until_ready(value_net_forward(x_small, w1, b1, w2, b2))
    assert out_small.shape == (8, 1)
    assert jnp.allclose(out_small, ref_fn(x_small), atol=1e-5, rtol=1e-5)

    # Larger ragged batch: exercises the multi-tile grid, batch padding, the
    # lane-dense output stores, and the "parallel" megacore axis.
    x_big = jax.random.normal(kx2, (1037, state_dim), jnp.float32)
    out_big = jax.block_until_ready(value_net_forward(x_big, w1, b1, w2, b2))
    assert out_big.shape == (1037, 1)
    assert jnp.allclose(out_big, ref_fn(x_big), atol=1e-5, rtol=1e-5)

    print("KERNEL_OK")
</pallas_src>

<mosaic_0001>
module attributes {stable_mosaic.version = 11 : i64} {
  func.func @value_net_kernel(%arg0: i32, %arg1: memref<8x16xf32, #tpu.memory_space<vmem>>, %arg2: memref<16x128xf32, #tpu.memory_space<vmem>>, %arg3: memref<1x128xf32, #tpu.memory_space<vmem>>, %arg4: memref<1x128xf32, #tpu.memory_space<vmem>>, %arg5: memref<1x1xf32, #tpu.memory_space<smem>>, %arg6: memref<1x8xf32, #tpu.memory_space<vmem>>) attributes {dimension_semantics = [#tpu.dimension_semantics<parallel>], iteration_bounds = array<i64: 1>, scalar_prefetch = 0 : i64, scratch_operands = 0 : i64, tpu.core_type = #tpu.core_type<tc>, window_params = [{transform_indices = @transform_0, window_bounds = array<i64: 8, 16>}, {pipeline_mode = #tpu.pipeline_mode<synchronous>, transform_indices = @transform_1, window_bounds = array<i64: 16, 128>}, {pipeline_mode = #tpu.pipeline_mode<synchronous>, transform_indices = @transform_2, window_bounds = array<i64: 1, 128>}, {pipeline_mode = #tpu.pipeline_mode<synchronous>, transform_indices = @transform_3, window_bounds = array<i64: 1, 128>}, {transform_indices = @transform_4, window_bounds = array<i64: 1, 1>}, {transform_indices = @transform_5, window_bounds = array<i64: 1, 8>}]} {
    %c0 = arith.constant 0 : index
    %c0_0 = arith.constant 0 : index
    %0 = vector.load %arg1[%c0, %c0_0] : memref<8x16xf32, #tpu.memory_space<vmem>>, vector<8x16xf32>
    %c0_1 = arith.constant 0 : index
    %c0_2 = arith.constant 0 : index
    %1 = vector.load %arg2[%c0_1, %c0_2] : memref<16x128xf32, #tpu.memory_space<vmem>>, vector<16x128xf32>
    %cst = arith.constant dense<0.000000e+00> : vector<8x128xf32>
    %2 = tpu.matmul %0, %1, %cst {dimension_numbers = #tpu.dot_dimension_numbers<[1], [0], [0], [1], [0, 0, 1, 1], [], []>} : vector<8x16xf32>, vector<16x128xf32>, vector<8x128xf32> -> vector<8x128xf32>
    %c0_3 = arith.constant 0 : index
    %c0_4 = arith.constant 0 : index
    %3 = vector.load %arg3[%c0_3, %c0_4] : memref<1x128xf32, #tpu.memory_space<vmem>>, vector<1x128xf32>
    %4 = vector.broadcast %3 : vector<1x128xf32> to vector<8x128xf32>
    %5 = arith.addf %2, %4 : vector<8x128xf32>
    %cst_5 = arith.constant 0.000000e+00 : f32
    %6 = vector.broadcast %cst_5 : f32 to vector<8x128xf32>
    %7 = arith.maximumf %5, %6 : vector<8x128xf32>
    %c0_6 = arith.constant 0 : index
    %c0_7 = arith.constant 0 : index
    %8 = vector.load %arg4[%c0_6, %c0_7] : memref<1x128xf32, #tpu.memory_space<vmem>>, vector<1x128xf32>
    %9 = vector.broadcast %8 : vector<1x128xf32> to vector<8x128xf32>
    %10 = arith.mulf %7, %9 : vector<8x128xf32>
    %cst_8 = arith.constant dense<0.000000e+00> : vector<8xf32>
    %11 = vector.multi_reduction <add>, %10, %cst_8 [1] : vector<8x128xf32> to vector<8xf32>
    %c0_9 = arith.constant 0 : index
    %c0_10 = arith.constant 0 : index
    %12 = memref.load %arg5[%c0_9, %c0_10] : memref<1x1xf32, #tpu.memory_space<smem>>
    %13 = vector.broadcast %12 : f32 to vector<8xf32>
    %14 = arith.addf %11, %13 : vector<8xf32>
    %15 = vector.shape_cast %14 : vector<8xf32> to vector<1x8xf32>
    %c0_11 = arith.constant 0 : index
    %c0_12 = arith.constant 0 : index
    %16 = vector.load %arg6[%c0_11, %c0_12] : memref<1x8xf32, #tpu.memory_space<vmem>>, vector<1x8xf32>
    tpu.vector_store %arg6[%c0_11, %c0_12], %15 {strides = array<i32>} : memref<1x8xf32, #tpu.memory_space<vmem>>, vector<1x8xf32>,
    return
  }
  func.func @transform_0(%arg0: i32) -> (i32, i32) {
    %c0_i32 = arith.constant 0 : i32
    %c0_i32_0 = arith.constant 0 : i32
    return %arg0, %c0_i32 : i32, i32
  }
  func.func @transform_1(%arg0: i32) -> (i32, i32) {
    %c0_i32 = arith.constant 0 : i32
    %c0_i32_0 = arith.constant 0 : i32
    %c0_i32_1 = arith.constant 0 : i32
    return %c0_i32, %c0_i32_0 : i32, i32
  }
  func.func @transform_2(%arg0: i32) -> (i32, i32) {
    %c0_i32 = arith.constant 0 : i32
    %c0_i32_0 = arith.constant 0 : i32
    %c0_i32_1 = arith.constant 0 : i32
    return %c0_i32, %c0_i32_0 : i32, i32
  }
  func.func @transform_3(%arg0: i32) -> (i32, i32) {
    %c0_i32 = arith.constant 0 : i32
    %c0_i32_0 = arith.constant 0 : i32
    %c0_i32_1 = arith.constant 0 : i32
    return %c0_i32, %c0_i32_0 : i32, i32
  }
  func.func @transform_4(%arg0: i32) -> (i32, i32) {
    %c0_i32 = arith.constant 0 : i32
    %c0_i32_0 = arith.constant 0 : i32
    %c0_i32_1 = arith.constant 0 : i32
    return %c0_i32, %c0_i32_0 : i32, i32
  }
  func.func @transform_5(%arg0: i32) -> (i32, i32) {
    %c0_i32 = arith.constant 0 : i32
    %c0_i32_0 = arith.constant 0 : i32
    return %c0_i32, %arg0 : i32, i32
  }
}

</mosaic_0001>

<llo_original>
// kernel: tpu_custom_call.1
$region0: #{tpu_custom_call.1}
  #allocation0 [shape = 'u32[]', space=smem, size = 0x4, offset = 0x4, fixed_abs, tag = 'smem constant byte address 0x4 - core index']
  #allocation1 [shape = 'u32[144,128]{1,0:T(1,128)}', space=vmem, size = 0x12000, scoped, tag = 'internal scratch']
  #allocation2 [shape = 'f32[1,1]{1,0:T(1,128)S(6)}', space=smem, size = 0x200, scoped, tag = 'scoped memory for tpu_custom_call.1']
  %s0 = inlined_call_operand.hbm [shape: f32[8,16], index: 0, kind: input, shape index: {}]
  %s1 = inlined_call_operand.hbm [shape: f32[16,128], index: 1, kind: input, shape index: {}]
  %s2 = inlined_call_operand.vmem [shape: f32[1,128], index: 2, kind: input, shape index: {}]
  %s3 = inlined_call_operand.vmem [shape: f32[1,128], index: 3, kind: input, shape index: {}]
  %s4 = inlined_call_operand.<no memory space> [shape: f32[1,1], index: 4, kind: input, shape index: {}]
  %s5 = inlined_call_operand.hbm [shape: f32[1,8], index: 5, kind: output, shape index: {}]
  %s6 = sld [smem:[#allocation0]]
  $region38: #{tpu_custom_call.1} parent=0
    _
  %s8 = ssub.s32 1, %s6
  %s9 = scalar_select 0, %s8, %s6
  %10 = sst [smem:[#allocation2]] %s4
  $region1: #{tpu_custom_call.1} parent=0
    #allocation3 [shape = 'u8[4096]{0}', space=vmem, size = 0x1000, scoped, tag = 'input window, operand 0, single buffered']
    #allocation4 [shape = 's32[1]{0}', space=sflag, size = 0x4, scoped, tag = 'scoped memory for tpu_custom_call.1']
    #allocation5 [shape = 's32[1]{0}', space=sflag, size = 0x4, scoped, tag = 'scoped memory for tpu_custom_call.1']
    #allocation6 [shape = 'u8[8192]{0}', space=vmem, size = 0x2000, scoped, tag = 'input window, operand 1, single buffered']
    #allocation7 [shape = 's32[1]{0}', space=sflag, size = 0x4, scoped, tag = 'scoped memory for tpu_custom_call.1']
    #allocation8 [shape = 'u8[512]{0}', space=vmem, size = 0x400, scoped, tag = 'output window, operand 0, single buffered']
    %11 = vsyncpa [#allocation4], 0
    %12 = vsyncpa [#allocation7], 0
    %13 = vsyncpa [#allocation5], 0
    // Predicated region
    $region2: #{tpu_custom_call.1} parent=1 // pred_check
      _
    $region3: #{tpu_custom_call.1} parent=1 // pred_check_branch
      %15 = sbr.rel (0) target = $region5
    $region4: #{tpu_custom_call.1} parent=1 // pred_region
      %s17 = ssub.s32 128, 128
      %18 = vsyncadd [#allocation4], %s17
      %s20 = sshll.u32 [#allocation3], 4
      %s21 = int_to_ptr.vmem [resolvable:$true] %s20
      %23 = dma.hbm_to_vmem [thread:$0]  %s0, 128, %s21, [#allocation4]
    $region5: #{tpu_custom_call.1} parent=1 // pred_fallthru
      _
    // Predicated region
    $region6: #{tpu_custom_call.1} parent=1 // pred_check
      _
    $region7: #{tpu_custom_call.1} parent=1 // pred_check_branch
      %25 = sbr.rel (0) target = $region9
    $region8: #{tpu_custom_call.1} parent=1 // pred_region
      %s27 = ssub.s32 256, 256
      %28 = vsyncadd [#allocation7], %s27
      %s29 = sshll.u32 [#allocation6], 4
      %s30 = int_to_ptr.vmem [resolvable:$true] %s29
      %35 = dma.hbm_to_vmem [thread:$0]  %s1, 256, %s30, [#allocation7], 128, 128, 8
    $region9: #{tpu_custom_call.1} parent=1 // pred_fallthru
      _
    // Predicated region
    $region10: #{tpu_custom_call.1} parent=1 // pred_check
      _
    $region11: #{tpu_custom_call.1} parent=1 // pred_check_branch
      %37 = sbr.rel (0) target = $region13
    $region12: #{tpu_custom_call.1} parent=1 // pred_region
      _
    $region13: #{tpu_custom_call.1} parent=1 // pred_fallthru
      _
    // Predicated region
    $region14: #{tpu_custom_call.1} parent=1 // pred_check
      _
    $region15: #{tpu_custom_call.1} parent=1 // pred_check_branch
      %39 = sbr.rel (0) target = $region17
    $region16: #{tpu_custom_call.1} parent=1 // pred_region
      _
    $region17: #{tpu_custom_call.1} parent=1 // pred_fallthru
      _
    // Predicated region
    $region18: #{tpu_custom_call.1} parent=1 // pred_check
      _
    $region19: #{tpu_custom_call.1} parent=1 // pred_check_branch
      %41 = sbr.rel (0) target = $region21
    $region20: #{tpu_custom_call.1} parent=1 // pred_region
      _
    $region21: #{tpu_custom_call.1} parent=1 // pred_fallthru
      _
    // Predicated region
    $region22: #{tpu_custom_call.1} parent=1 // pred_check
      _
    $region23: #{tpu_custom_call.1} parent=1 // pred_check_branch
      %43 = sbr.rel (0) target = $region25
    $region24: #{tpu_custom_call.1} parent=1 // pred_region
      %44 = dma.done [#allocation4], 128
    $region25: #{tpu_custom_call.1} parent=1 // pred_fallthru
      _
    // Predicated region
    $region26: #{tpu_custom_call.1} parent=1 // pred_check
      _
    $region27: #{tpu_custom_call.1} parent=1 // pred_check_branch
      %46 = sbr.rel (0) target = $region29
    $region28: #{tpu_custom_call.1} parent=1 // pred_region
      %47 = dma.done [#allocation7], 256
    $region29: #{tpu_custom_call.1} parent=1 // pred_fallthru
      _
    %v48 = vld [vmem:[#allocation3] sm:$0xff]
    %v49 = vld [vmem:[#allocation6] sm:$0xff]
    %v50 = vld [vmem:[#allocation6 + $0x8] sm:$0xff]
    %v51 = vld [vmem:[%s2] sm:$0x1]
    %v53 = vlaneseq
    %v54 = vshrl.u32 %v53, 7
    %v55 = vsub.s32 0, %v54
    %v56 = vrot.slane %v51, %v55
    %vm58 = vcmask 130048
    %v60 = vsel %vm58, %v48, 0
    %62 = vmatprep.subr.mxu0 0.0
    %63 = vmatpush1.msra.mxu0 %v49
    %64 = vmatprep.subr.mxu0 0.0
    %65 = vmatpush1.msra.mxu0 %v50
    %66 = vmatprep.subr.mxu0 0.0
    %67 = vmatpush1.msra.mxu0 0.0
    %68 = vmatprep.subr.mxu0 0.0
    %69 = vmatpush1.msra.mxu0 0.0
    %70 = vmatprep.subr.mxu0 0.0
    %71 = vmatpush1.msra.mxu0 0.0
    %72 = vmatprep.subr.mxu0 0.0
    %73 = vmatpush1.msra.mxu0 0.0
    %74 = vmatprep.subr.mxu0 0.0
    %75 = vmatpush1.msra.mxu0 0.0
    %76 = vmatprep.subr.mxu0 0.0
    %77 = vmatpush1.msra.mxu0 0.0
    %78 = vmatprep.subr.mxu0 0.0
    %79 = vmatpush1.msra.mxu0 0.0
    %80 = vmatprep.subr.mxu0 0.0
    %81 = vmatpush1.msra.mxu0 0.0
    %82 = vmatprep.subr.mxu0 0.0
    %83 = vmatpush1.msra.mxu0 0.0
    %84 = vmatprep.subr.mxu0 0.0
    %85 = vmatpush1.msra.mxu0 0.0
    %86 = vmatprep.subr.mxu0 0.0
    %87 = vmatpush1.msra.mxu0 0.0
    %88 = vmatprep.subr.mxu0 0.0
    %89 = vmatpush1.msra.mxu0 0.0
    %90 = vmatprep.subr.mxu0 0.0
    %91 = vmatpush1.msra.mxu0 0.0
    %92 = vmatprep.subr.mxu0 0.0
    %93 = vmatpush1.msra.mxu0 0.0
    %94 = vmatprep.subr.mxu0 0.0
    %95 = vmatpush1.msra.mxu0 0.0
    %96 = vmatprep.subr.mxu0 0.0
    %97 = vmatpush1.msra.mxu0 0.0
    %98 = vmatprep.subr.mxu0 0.0
    %99 = vmatpush1.msra.mxu0 0.0
    %100 = vmatprep.subr.mxu0 0.0
    %101 = vmatpush1.msra.mxu0 0.0
    %102 = vmatprep.subr.mxu0 0.0
    %103 = vmatpush1.msra.mxu0 0.0
    %104 = vmatprep.subr.mxu0 0.0
    %105 = vmatpush1.msra.mxu0 0.0
    %106 = vmatprep.subr.mxu0 0.0
    %107 = vmatpush1.msra.mxu0 0.0
    %108 = vmatprep.subr.mxu0 0.0
    %109 = vmatpush1.msra.mxu0 0.0
    %110 = vmatprep.subr.mxu0 0.0
    %111 = vmatpush1.msra.mxu0 0.0
    %112 = vmatprep.subr.mxu0 0.0
    %113 = vmatpush1.msra.mxu0 0.0
    %114 = vmatprep.subr.mxu0 0.0
    %115 = vmatpush1.msra.mxu0 0.0
    %116 = vmatprep.subr.mxu0 0.0
    %117 = vmatpush1.msra.mxu0 0.0
    %118 = vmatprep.subr.mxu0 0.0
    %119 = vmatpush1.msra.mxu0 0.0
    %120 = vmatprep.subr.mxu0 0.0
    %121 = vmatpush1.msra.mxu0 0.0
    %122 = vmatprep.subr.mxu0 0.0
    %123 = vmatpush1.msra.mxu0 0.0
    %124 = vmatprep.subr.mxu0 0.0
    %125 = vmatpush1.msra.mxu0 0.0
    %126 = vmatprep.mubr.f32.mxu0 0.0
    %127 = vmatmul.mubr.f32.gmra.mrb[0].mxu0 %v60
    %v128 = vpop.f32.mrb[0].mxu0
    %v129 = vadd.f32 %v56, %v128
    %v130 = vpop.f32.mrb[0].mxu0
    %131 = vdwg.mxu0
    %v132 = vmax.f32 %v129, 0.0
    %v133 = vld [vmem:[%s3] sm:$0x1]
    %v135 = vlaneseq
    %v136 = vshrl.u32 %v135, 7
    %v137 = vsub.s32 0, %v136
    %v138 = vrot.slane %v133, %v137
    %v140 = vmul.f32 %v132, %v138
    %141 = vadd.xlane.f32.xlu0 %v140
    %v142 = vpop.xlane.xlu0 %141
    %s143 = sld [smem:[#allocation2]]
    %v144 = vstv %s143
    %v145 = vadd.f32 %v142, %v144
    %v147 = vlaneseq
    %v148 = vand.u32 %v147, 127
    %v149 = vlaneseq
    %v150 = vshrl.u32 %v149, 7
    %v151 = vsub.s32 %v148, %v150
    %v152 = vrot.slane %v145, %v151
    %vm154 = vcmask 57344
    %155 = vst.msk [vmem:[#allocation8] sm:$0x1] %vm154, %v152
    // Predicated region
    $region30: #{tpu_custom_call.1} parent=1 // pred_check
      _
    $region31: #{tpu_custom_call.1} parent=1 // pred_check_branch
      %157 = sbr.rel (0) target = $region33
    $region32: #{tpu_custom_call.1} parent=1 // pred_region
      %s159 = ssub.s32 16, 16
      %160 = vsyncadd [#allocation5], %s159
      %s162 = sshll.u32 [#allocation8], 4
      %s163 = int_to_ptr.vmem [resolvable:$true] %s162
      %165 = dma.vmem_to_hbm [thread:$0]  %s163, 16, %s5, [#allocation5]
    $region33: #{tpu_custom_call.1} parent=1 // pred_fallthru
      _
    // Predicated region
    $region34: #{tpu_custom_call.1} parent=1 // pred_check
      _
    $region35: #{tpu_custom_call.1} parent=1 // pred_check_branch
      %167 = sbr.rel (0) target = $region37
    $region36: #{tpu_custom_call.1} parent=1 // pred_region
      %168 = dma.done [#allocation5], 16
    $region37: #{tpu_custom_call.1} parent=1 // pred_fallthru
      _
    %169 = vsyncpa [#allocation4], 1
    %170 = vsyncpa [#allocation7], 1
    %171 = vsyncpa [#allocation5], 1

</llo_original>
